<compile_context>
chip_gen: v7x
topology: tpu7x:2x2x1
jax: 0.10.0
libtpu: 0.0.40
codegen_flags: <defaults>
</compile_context>

<pallas_src>
import jax
import jax.numpy as jnp
from jax.experimental import pallas as pl
from jax.experimental.pallas import tpu as pltpu


def _make_rb_kernel(H, W, C, K):
    P = K // 2
    S = H * W
    KKC = K * K * C
    # Lane-aligned halo, wide enough for the largest flattened shift (P*W + P).
    PADL = ((P * W + P + 127) // 128) * 128

    def rb_kernel(x_ref, w1_ref, b1_ref, w2_ref, b2_ref, out_ref,
                  xpad_ref, patches_ref):
        x2d = x_ref[0].astype(jnp.float32)                 # (C, S), lane-dense

        # Zero only the halo borders (the interior is fully overwritten before
        # every use).  Two aligned (C, PADL) stores per grid step.
        zeros_halo = jnp.zeros((C, PADL), jnp.float32)
        xpad_ref[:, :PADL] = zeros_halo
        xpad_ref[:, PADL + S:] = zeros_halo

        # Column index of every flattened spatial position, for masking the
        # left/right image borders (top/bottom borders land in the zero halo).
        w_idx = jax.lax.broadcasted_iota(jnp.int32, (C, S), 1) % W
        col_mask = {dw: (w_idx >= -dw) if dw < 0 else (w_idx < W - dw)
                    for dw in range(-P, P + 1) if dw != 0}

        def conv_same(src2d, w_ref_, b_ref_):
            # im2col into VMEM scratch, then a single fused MXU matmul.
            xpad_ref[:, PADL:PADL + S] = src2d
            for kh in range(K):
                dh = kh - P
                for kw in range(K):
                    dw = kw - P
                    off = PADL + dh * W + dw
                    tap = xpad_ref[:, off:off + S]          # (C, S) shifted image
                    if dw != 0:
                        tap = jnp.where(col_mask[dw], tap, 0.0)
                    t = kh * K + kw
                    patches_ref[t * C:(t + 1) * C, :] = tap
            y = jnp.dot(w_ref_[...], patches_ref[...],
                        preferred_element_type=jnp.float32)  # (C_out, S)
            return y + b_ref_[...]                           # bias (C,1) bcast

        y = jnp.maximum(conv_same(x2d, w1_ref, b1_ref), 0.0)  # conv1 + ReLU
        y = conv_same(y, w2_ref, b2_ref) + x2d                # conv2 + residual
        out_ref[0] = y.astype(out_ref.dtype)

    return rb_kernel, S, KKC, PADL


def rb_forward(x_nchw, w1_oihw, b1, w2_oihw, b2):
    """x: (N, C, H, W).  w: (C_out, C_in, K, K) (PyTorch OIHW).  b: (C_out,)."""
    N, C, H, W = x_nchw.shape
    K = w1_oihw.shape[-1]
    kernel, S, KKC, PADL = _make_rb_kernel(H, W, C, K)

    # Glue: cheap reshapes of x / tiny weight tensors only (no padded x copy).
    x_flat = x_nchw.reshape(N, C, S)                              # lane-dense
    w1m = jnp.transpose(w1_oihw, (0, 2, 3, 1)).reshape(C, KKC)    # (C_out, K*K*C_in)
    w2m = jnp.transpose(w2_oihw, (0, 2, 3, 1)).reshape(C, KKC)
    b1c = b1.reshape(C, 1)
    b2c = b2.reshape(C, 1)

    out = pl.pallas_call(
        kernel,
        out_shape=jax.ShapeDtypeStruct((N, C, S), x_nchw.dtype),
        grid_spec=pltpu.PrefetchScalarGridSpec(
            num_scalar_prefetch=0,
            grid=(N,),
            in_specs=[
                pl.BlockSpec((1, C, S), lambda n: (n, 0, 0)),     # x (also residual)
                pl.BlockSpec((C, KKC), lambda n: (0, 0)),         # w1 (resident)
                pl.BlockSpec((C, 1), lambda n: (0, 0)),           # b1
                pl.BlockSpec((C, KKC), lambda n: (0, 0)),         # w2
                pl.BlockSpec((C, 1), lambda n: (0, 0)),           # b2
            ],
            out_specs=pl.BlockSpec((1, C, S), lambda n: (n, 0, 0)),
            scratch_shapes=[
                pltpu.VMEM((C, 2 * PADL + S), jnp.float32),       # flattened halo pad
                pltpu.VMEM((KKC, S), jnp.float32),                # im2col patches
            ],
        ),
        compiler_params=pltpu.CompilerParams(
            dimension_semantics=("parallel",)),
    )(x_flat, w1m, b1c, w2m, b2c)
    return out.reshape(N, C, H, W)


def rb_reference(x_nchw, w1_oihw, b1, w2_oihw, b2):
    """Pure-JAX reference (same semantics as PyTorch RB.forward)."""
    dn = ("NCHW", "OIHW", "NCHW")
    y = jax.lax.conv_general_dilated(x_nchw, w1_oihw, (1, 1), "SAME",
                                     dimension_numbers=dn)
    y = y + b1[None, :, None, None]
    y = jnp.maximum(y, 0.0)
    y = jax.lax.conv_general_dilated(y, w2_oihw, (1, 1), "SAME",
                                     dimension_numbers=dn)
    y = y + b2[None, :, None, None]
    return y + x_nchw


if __name__ == "__main__":
    # Small shapes consistent with the module: n_feat=4, kernel_size=3.
    N, C, H, W, K = 2, 4, 16, 16, 3

    key = jax.random.PRNGKey(0)
    kx, kw1, kb1, kw2, kb2 = jax.random.split(key, 5)

    x_nchw = jax.random.normal(kx, (N, C, H, W), dtype=jnp.float32)  # PyTorch NCHW
    scale = 1.0 / (C * K * K) ** 0.5
    w1 = jax.random.uniform(kw1, (C, C, K, K), jnp.float32, -scale, scale)  # OIHW
    b1 = jax.random.uniform(kb1, (C,), jnp.float32, -scale, scale)
    w2 = jax.random.uniform(kw2, (C, C, K, K), jnp.float32, -scale, scale)
    b2 = jax.random.uniform(kb2, (C,), jnp.float32, -scale, scale)

    out = jax.block_until_ready(rb_forward(x_nchw, w1, b1, w2, b2))
    ref = rb_reference(x_nchw, w1, b1, w2, b2)

    assert out.shape == (N, C, H, W)
    assert jnp.allclose(out, ref, atol=1e-4, rtol=1e-4), "mismatch vs reference"

    print("KERNEL_OK")
</pallas_src>

<mosaic_0001>
module attributes {stable_mosaic.version = 11 : i64} {
  func.func @rb_kernel(%arg0: i32, %arg1: memref<1x4x256xf32, #tpu.memory_space<vmem>>, %arg2: memref<4x36xf32, #tpu.memory_space<vmem>>, %arg3: memref<4x1xf32, #tpu.memory_space<vmem>>, %arg4: memref<4x36xf32, #tpu.memory_space<vmem>>, %arg5: memref<4x1xf32, #tpu.memory_space<vmem>>, %arg6: memref<1x4x256xf32, #tpu.memory_space<vmem>>, %arg7: memref<4x512xf32, #tpu.memory_space<vmem>>, %arg8: memref<36x256xf32, #tpu.memory_space<vmem>>) attributes {dimension_semantics = [#tpu.dimension_semantics<parallel>], iteration_bounds = array<i64: 2>, scalar_prefetch = 0 : i64, scratch_operands = 2 : i64, tpu.core_type = #tpu.core_type<tc>, window_params = [{transform_indices = @transform_0, window_bounds = array<i64: 1, 4, 256>}, {pipeline_mode = #tpu.pipeline_mode<synchronous>, transform_indices = @transform_1, window_bounds = array<i64: 4, 36>}, {pipeline_mode = #tpu.pipeline_mode<synchronous>, transform_indices = @transform_2, window_bounds = array<i64: 4, 1>}, {pipeline_mode = #tpu.pipeline_mode<synchronous>, transform_indices = @transform_3, window_bounds = array<i64: 4, 36>}, {pipeline_mode = #tpu.pipeline_mode<synchronous>, transform_indices = @transform_4, window_bounds = array<i64: 4, 1>}, {transform_indices = @transform_5, window_bounds = array<i64: 1, 4, 256>}]} {
    %c0 = arith.constant 0 : index
    %c0_0 = arith.constant 0 : index
    %c0_1 = arith.constant 0 : index
    %0 = vector.load %arg1[%c0, %c0_0, %c0_1] : memref<1x4x256xf32, #tpu.memory_space<vmem>>, vector<1x4x256xf32>
    %1 = vector.shape_cast %0 : vector<1x4x256xf32> to vector<4x256xf32>
    %cst = arith.constant 0.000000e+00 : f32
    %2 = vector.broadcast %cst : f32 to vector<4x128xf32>
    %c0_2 = arith.constant 0 : index
    %c0_3 = arith.constant 0 : index
    %3 = vector.load %arg7[%c0_2, %c0_3] : memref<4x512xf32, #tpu.memory_space<vmem>>, vector<4x128xf32>
    tpu.vector_store %arg7[%c0_2, %c0_3], %2 {strides = array<i32>} : memref<4x512xf32, #tpu.memory_space<vmem>>, vector<4x128xf32>,
    %c0_4 = arith.constant 0 : index
    %c384 = arith.constant 384 : index
    %4 = vector.load %arg7[%c0_4, %c384] : memref<4x512xf32, #tpu.memory_space<vmem>>, vector<4x128xf32>
    tpu.vector_store %arg7[%c0_4, %c384], %2 {strides = array<i32>} : memref<4x512xf32, #tpu.memory_space<vmem>>, vector<4x128xf32>,
    %5 = tpu.iota {dimensions = array<i32: 1>} : vector<4x256xi32>
    %c16_i32 = arith.constant 16 : i32
    %c0_i32 = arith.constant 0 : i32
    %6 = arith.cmpi eq, %c16_i32, %c0_i32 : i32
    %c1_i32 = arith.constant 1 : i32
    %7 = arith.select %6, %c1_i32, %c16_i32 : i32
    %8 = vector.broadcast %7 : i32 to vector<4x256xi32>
    %9 = arith.remsi %5, %8 : vector<4x256xi32>
    %c0_i32_5 = arith.constant 0 : i32
    %10 = vector.broadcast %c0_i32_5 : i32 to vector<4x256xi32>
    %11 = arith.cmpi ne, %9, %10 : vector<4x256xi32>
    %c0_i32_6 = arith.constant 0 : i32
    %12 = vector.broadcast %c0_i32_6 : i32 to vector<4x256xi32>
    %13 = arith.cmpi slt, %9, %12 : vector<4x256xi32>
    %c0_i32_7 = arith.constant 0 : i32
    %14 = arith.cmpi slt, %7, %c0_i32_7 : i32
    %15 = vector.broadcast %14 : i1 to vector<4x256xi1>
    %16 = vector.broadcast %15 : vector<4x256xi1> to vector<4x256xi1>
    %17 = arith.xori %13, %16 : vector<4x256xi1>
    %18 = arith.andi %17, %11 : vector<4x256xi1>
    %19 = vector.broadcast %7 : i32 to vector<4x256xi32>
    %20 = arith.addi %9, %19 : vector<4x256xi32>
    %21 = arith.select %18, %20, %9 : vector<4x256xi1>, vector<4x256xi32>
    %c1_i32_8 = arith.constant 1 : i32
    %22 = vector.broadcast %c1_i32_8 : i32 to vector<4x256xi32>
    %23 = arith.cmpi sge, %21, %22 : vector<4x256xi32>
    %c15_i32 = arith.constant 15 : i32
    %24 = vector.broadcast %c15_i32 : i32 to vector<4x256xi32>
    %25 = arith.cmpi slt, %21, %24 : vector<4x256xi32>
    %c0_9 = arith.constant 0 : index
    %c128 = arith.constant 128 : index
    %26 = vector.load %arg7[%c0_9, %c128] : memref<4x512xf32, #tpu.memory_space<vmem>>, vector<4x256xf32>
    tpu.vector_store %arg7[%c0_9, %c128], %1 {strides = array<i32>} : memref<4x512xf32, #tpu.memory_space<vmem>>, vector<4x256xf32>,
    %c0_10 = arith.constant 0 : index
    %c111 = arith.constant 111 : index
    %27 = vector.load %arg7[%c0_10, %c111] : memref<4x512xf32, #tpu.memory_space<vmem>>, vector<4x256xf32>
    %cst_11 = arith.constant 0.000000e+00 : f32
    %28 = vector.broadcast %cst_11 : f32 to vector<4x256xf32>
    %29 = arith.select %23, %27, %28 : vector<4x256xi1>, vector<4x256xf32>
    %c0_12 = arith.constant 0 : index
    %c0_13 = arith.constant 0 : index
    %30 = vector.load %arg8[%c0_12, %c0_13] : memref<36x256xf32, #tpu.memory_space<vmem>>, vector<4x256xf32>
    tpu.vector_store %arg8[%c0_12, %c0_13], %29 {strides = array<i32>} : memref<36x256xf32, #tpu.memory_space<vmem>>, vector<4x256xf32>,
    %c0_14 = arith.constant 0 : index
    %c112 = arith.constant 112 : index
    %31 = vector.load %arg7[%c0_14, %c112] : memref<4x512xf32, #tpu.memory_space<vmem>>, vector<4x256xf32>
    %c4 = arith.constant 4 : index
    %c0_15 = arith.constant 0 : index
    %32 = vector.load %arg8[%c4, %c0_15] : memref<36x256xf32, #tpu.memory_space<vmem>>, vector<4x256xf32>
    tpu.vector_store %arg8[%c4, %c0_15], %31 {strides = array<i32>} : memref<36x256xf32, #tpu.memory_space<vmem>>, vector<4x256xf32>,
    %c0_16 = arith.constant 0 : index
    %c113 = arith.constant 113 : index
    %33 = vector.load %arg7[%c0_16, %c113] : memref<4x512xf32, #tpu.memory_space<vmem>>, vector<4x256xf32>
    %cst_17 = arith.constant 0.000000e+00 : f32
    %34 = vector.broadcast %cst_17 : f32 to vector<4x256xf32>
    %35 = arith.select %25, %33, %34 : vector<4x256xi1>, vector<4x256xf32>
    %c8 = arith.constant 8 : index
    %c0_18 = arith.constant 0 : index
    %36 = vector.load %arg8[%c8, %c0_18] : memref<36x256xf32, #tpu.memory_space<vmem>>, vector<4x256xf32>
    tpu.vector_store %arg8[%c8, %c0_18], %35 {strides = array<i32>} : memref<36x256xf32, #tpu.memory_space<vmem>>, vector<4x256xf32>,
    %c0_19 = arith.constant 0 : index
    %c127 = arith.constant 127 : index
    %37 = vector.load %arg7[%c0_19, %c127] : memref<4x512xf32, #tpu.memory_space<vmem>>, vector<4x256xf32>
    %cst_20 = arith.constant 0.000000e+00 : f32
    %38 = vector.broadcast %cst_20 : f32 to vector<4x256xf32>
    %39 = arith.select %23, %37, %38 : vector<4x256xi1>, vector<4x256xf32>
    %c12 = arith.constant 12 : index
    %c0_21 = arith.constant 0 : index
    %40 = vector.load %arg8[%c12, %c0_21] : memref<36x256xf32, #tpu.memory_space<vmem>>, vector<4x256xf32>
    tpu.vector_store %arg8[%c12, %c0_21], %39 {strides = array<i32>} : memref<36x256xf32, #tpu.memory_space<vmem>>, vector<4x256xf32>,
    %c0_22 = arith.constant 0 : index
    %c128_23 = arith.constant 128 : index
    %41 = vector.load %arg7[%c0_22, %c128_23] : memref<4x512xf32, #tpu.memory_space<vmem>>, vector<4x256xf32>
    %c16 = arith.constant 16 : index
    %c0_24 = arith.constant 0 : index
    %42 = vector.load %arg8[%c16, %c0_24] : memref<36x256xf32, #tpu.memory_space<vmem>>, vector<4x256xf32>
    tpu.vector_store %arg8[%c16, %c0_24], %41 {strides = array<i32>} : memref<36x256xf32, #tpu.memory_space<vmem>>, vector<4x256xf32>,
    %c0_25 = arith.constant 0 : index
    %c129 = arith.constant 129 : index
    %43 = vector.load %arg7[%c0_25, %c129] : memref<4x512xf32, #tpu.memory_space<vmem>>, vector<4x256xf32>
    %cst_26 = arith.constant 0.000000e+00 : f32
    %44 = vector.broadcast %cst_26 : f32 to vector<4x256xf32>
    %45 = arith.select %25, %43, %44 : vector<4x256xi1>, vector<4x256xf32>
    %c20 = arith.constant 20 : index
    %c0_27 = arith.constant 0 : index
    %46 = vector.load %arg8[%c20, %c0_27] : memref<36x256xf32, #tpu.memory_space<vmem>>, vector<4x256xf32>
    tpu.vector_store %arg8[%c20, %c0_27], %45 {strides = array<i32>} : memref<36x256xf32, #tpu.memory_space<vmem>>, vector<4x256xf32>,
    %c0_28 = arith.constant 0 : index
    %c143 = arith.constant 143 : index
    %47 = vector.load %arg7[%c0_28, %c143] : memref<4x512xf32, #tpu.memory_space<vmem>>, vector<4x256xf32>
    %cst_29 = arith.constant 0.000000e+00 : f32
    %48 = vector.broadcast %cst_29 : f32 to vector<4x256xf32>
    %49 = arith.select %23, %47, %48 : vector<4x256xi1>, vector<4x256xf32>
    %c24 = arith.constant 24 : index
    %c0_30 = arith.constant 0 : index
    %50 = vector.load %arg8[%c24, %c0_30] : memref<36x256xf32, #tpu.memory_space<vmem>>, vector<4x256xf32>
    tpu.vector_store %arg8[%c24, %c0_30], %49 {strides = array<i32>} : memref<36x256xf32, #tpu.memory_space<vmem>>, vector<4x256xf32>,
    %c0_31 = arith.constant 0 : index
    %c144 = arith.constant 144 : index
    %51 = vector.load %arg7[%c0_31, %c144] : memref<4x512xf32, #tpu.memory_space<vmem>>, vector<4x256xf32>
    %c28 = arith.constant 28 : index
    %c0_32 = arith.constant 0 : index
    %52 = vector.load %arg8[%c28, %c0_32] : memref<36x256xf32, #tpu.memory_space<vmem>>, vector<4x256xf32>
    tpu.vector_store %arg8[%c28, %c0_32], %51 {strides = array<i32>} : memref<36x256xf32, #tpu.memory_space<vmem>>, vector<4x256xf32>,
    %c0_33 = arith.constant 0 : index
    %c145 = arith.constant 145 : index
    %53 = vector.load %arg7[%c0_33, %c145] : memref<4x512xf32, #tpu.memory_space<vmem>>, vector<4x256xf32>
    %cst_34 = arith.constant 0.000000e+00 : f32
    %54 = vector.broadcast %cst_34 : f32 to vector<4x256xf32>
    %55 = arith.select %25, %53, %54 : vector<4x256xi1>, vector<4x256xf32>
    %c32 = arith.constant 32 : index
    %c0_35 = arith.constant 0 : index
    %56 = vector.load %arg8[%c32, %c0_35] : memref<36x256xf32, #tpu.memory_space<vmem>>, vector<4x256xf32>
    tpu.vector_store %arg8[%c32, %c0_35], %55 {strides = array<i32>} : memref<36x256xf32, #tpu.memory_space<vmem>>, vector<4x256xf32>,
    %c0_36 = arith.constant 0 : index
    %c0_37 = arith.constant 0 : index
    %57 = vector.load %arg2[%c0_36, %c0_37] : memref<4x36xf32, #tpu.memory_space<vmem>>, vector<4x36xf32>
    %c0_38 = arith.constant 0 : index
    %c0_39 = arith.constant 0 : index
    %58 = vector.load %arg8[%c0_38, %c0_39] : memref<36x256xf32, #tpu.memory_space<vmem>>, vector<36x256xf32>
    %cst_40 = arith.constant dense<0.000000e+00> : vector<4x256xf32>
    %59 = tpu.matmul %57, %58, %cst_40 {dimension_numbers = #tpu.dot_dimension_numbers<[1], [0], [0], [1], [0, 0, 1, 1], [], []>} : vector<4x36xf32>, vector<36x256xf32>, vector<4x256xf32> -> vector<4x256xf32>
    %c0_41 = arith.constant 0 : index
    %c0_42 = arith.constant 0 : index
    %60 = vector.load %arg3[%c0_41, %c0_42] : memref<4x1xf32, #tpu.memory_space<vmem>>, vector<4x1xf32>
    %61 = vector.broadcast %60 : vector<4x1xf32> to vector<4x256xf32>
    %62 = arith.addf %59, %61 : vector<4x256xf32>
    %cst_43 = arith.constant 0.000000e+00 : f32
    %63 = vector.broadcast %cst_43 : f32 to vector<4x256xf32>
    %64 = arith.maximumf %62, %63 : vector<4x256xf32>
    %c0_44 = arith.constant 0 : index
    %c128_45 = arith.constant 128 : index
    %65 = vector.load %arg7[%c0_44, %c128_45] : memref<4x512xf32, #tpu.memory_space<vmem>>, vector<4x256xf32>
    tpu.vector_store %arg7[%c0_44, %c128_45], %64 {strides = array<i32>} : memref<4x512xf32, #tpu.memory_space<vmem>>, vector<4x256xf32>,
    %c0_46 = arith.constant 0 : index
    %c111_47 = arith.constant 111 : index
    %66 = vector.load %arg7[%c0_46, %c111_47] : memref<4x512xf32, #tpu.memory_space<vmem>>, vector<4x256xf32>
    %cst_48 = arith.constant 0.000000e+00 : f32
    %67 = vector.broadcast %cst_48 : f32 to vector<4x256xf32>
    %68 = arith.select %23, %66, %67 : vector<4x256xi1>, vector<4x256xf32>
    %c0_49 = arith.constant 0 : index
    %c0_50 = arith.constant 0 : index
    %69 = vector.load %arg8[%c0_49, %c0_50] : memref<36x256xf32, #tpu.memory_space<vmem>>, vector<4x256xf32>
    tpu.vector_store %arg8[%c0_49, %c0_50], %68 {strides = array<i32>} : memref<36x256xf32, #tpu.memory_space<vmem>>, vector<4x256xf32>,
    %c0_51 = arith.constant 0 : index
    %c112_52 = arith.constant 112 : index
    %70 = vector.load %arg7[%c0_51, %c112_52] : memref<4x512xf32, #tpu.memory_space<vmem>>, vector<4x256xf32>
    %c4_53 = arith.constant 4 : index
    %c0_54 = arith.constant 0 : index
    %71 = vector.load %arg8[%c4_53, %c0_54] : memref<36x256xf32, #tpu.memory_space<vmem>>, vector<4x256xf32>
    tpu.vector_store %arg8[%c4_53, %c0_54], %70 {strides = array<i32>} : memref<36x256xf32, #tpu.memory_space<vmem>>, vector<4x256xf32>,
    %c0_55 = arith.constant 0 : index
    %c113_56 = arith.constant 113 : index
    %72 = vector.load %arg7[%c0_55, %c113_56] : memref<4x512xf32, #tpu.memory_space<vmem>>, vector<4x256xf32>
    %cst_57 = arith.constant 0.000000e+00 : f32
    %73 = vector.broadcast %cst_57 : f32 to vector<4x256xf32>
    %74 = arith.select %25, %72, %73 : vector<4x256xi1>, vector<4x256xf32>
    %c8_58 = arith.constant 8 : index
    %c0_59 = arith.constant 0 : index
    %75 = vector.load %arg8[%c8_58, %c0_59] : memref<36x256xf32, #tpu.memory_space<vmem>>, vector<4x256xf32>
    tpu.vector_store %arg8[%c8_58, %c0_59], %74 {strides = array<i32>} : memref<36x256xf32, #tpu.memory_space<vmem>>, vector<4x256xf32>,
    %c0_60 = arith.constant 0 : index
    %c127_61 = arith.constant 127 : index
    %76 = vector.load %arg7[%c0_60, %c127_61] : memref<4x512xf32, #tpu.memory_space<vmem>>, vector<4x256xf32>
    %cst_62 = arith.constant 0.000000e+00 : f32
    %77 = vector.broadcast %cst_62 : f32 to vector<4x256xf32>
    %78 = arith.select %23, %76, %77 : vector<4x256xi1>, vector<4x256xf32>
    %c12_63 = arith.constant 12 : index
    %c0_64 = arith.constant 0 : index
    %79 = vector.load %arg8[%c12_63, %c0_64] : memref<36x256xf32, #tpu.memory_space<vmem>>, vector<4x256xf32>
    tpu.vector_store %arg8[%c12_63, %c0_64], %78 {strides = array<i32>} : memref<36x256xf32, #tpu.memory_space<vmem>>, vector<4x256xf32>,
    %c0_65 = arith.constant 0 : index
    %c128_66 = arith.constant 128 : index
    %80 = vector.load %arg7[%c0_65, %c128_66] : memref<4x512xf32, #tpu.memory_space<vmem>>, vector<4x256xf32>
    %c16_67 = arith.constant 16 : index
    %c0_68 = arith.constant 0 : index
    %81 = vector.load %arg8[%c16_67, %c0_68] : memref<36x256xf32, #tpu.memory_space<vmem>>, vector<4x256xf32>
    tpu.vector_store %arg8[%c16_67, %c0_68], %80 {strides = array<i32>} : memref<36x256xf32, #tpu.memory_space<vmem>>, vector<4x256xf32>,
    %c0_69 = arith.constant 0 : index
    %c129_70 = arith.constant 129 : index
    %82 = vector.load %arg7[%c0_69, %c129_70] : memref<4x512xf32, #tpu.memory_space<vmem>>, vector<4x256xf32>
    %cst_71 = arith.constant 0.000000e+00 : f32
    %83 = vector.broadcast %cst_71 : f32 to vector<4x256xf32>
    %84 = arith.select %25, %82, %83 : vector<4x256xi1>, vector<4x256xf32>
    %c20_72 = arith.constant 20 : index
    %c0_73 = arith.constant 0 : index
    %85 = vector.load %arg8[%c20_72, %c0_73] : memref<36x256xf32, #tpu.memory_space<vmem>>, vector<4x256xf32>
    tpu.vector_store %arg8[%c20_72, %c0_73], %84 {strides = array<i32>} : memref<36x256xf32, #tpu.memory_space<vmem>>, vector<4x256xf32>,
    %c0_74 = arith.constant 0 : index
    %c143_75 = arith.constant 143 : index
    %86 = vector.load %arg7[%c0_74, %c143_75] : memref<4x512xf32, #tpu.memory_space<vmem>>, vector<4x256xf32>
    %cst_76 = arith.constant 0.000000e+00 : f32
    %87 = vector.broadcast %cst_76 : f32 to vector<4x256xf32>
    %88 = arith.select %23, %86, %87 : vector<4x256xi1>, vector<4x256xf32>
    %c24_77 = arith.constant 24 : index
    %c0_78 = arith.constant 0 : index
    %89 = vector.load %arg8[%c24_77, %c0_78] : memref<36x256xf32, #tpu.memory_space<vmem>>, vector<4x256xf32>
    tpu.vector_store %arg8[%c24_77, %c0_78], %88 {strides = array<i32>} : memref<36x256xf32, #tpu.memory_space<vmem>>, vector<4x256xf32>,
    %c0_79 = arith.constant 0 : index
    %c144_80 = arith.constant 144 : index
    %90 = vector.load %arg7[%c0_79, %c144_80] : memref<4x512xf32, #tpu.memory_space<vmem>>, vector<4x256xf32>
    %c28_81 = arith.constant 28 : index
    %c0_82 = arith.constant 0 : index
    %91 = vector.load %arg8[%c28_81, %c0_82] : memref<36x256xf32, #tpu.memory_space<vmem>>, vector<4x256xf32>
    tpu.vector_store %arg8[%c28_81, %c0_82], %90 {strides = array<i32>} : memref<36x256xf32, #tpu.memory_space<vmem>>, vector<4x256xf32>,
    %c0_83 = arith.constant 0 : index
    %c145_84 = arith.constant 145 : index
    %92 = vector.load %arg7[%c0_83, %c145_84] : memref<4x512xf32, #tpu.memory_space<vmem>>, vector<4x256xf32>
    %cst_85 = arith.constant 0.000000e+00 : f32
    %93 = vector.broadcast %cst_85 : f32 to vector<4x256xf32>
    %94 = arith.select %25, %92, %93 : vector<4x256xi1>, vector<4x256xf32>
    %c32_86 = arith.constant 32 : index
    %c0_87 = arith.constant 0 : index
    %95 = vector.load %arg8[%c32_86, %c0_87] : memref<36x256xf32, #tpu.memory_space<vmem>>, vector<4x256xf32>
    tpu.vector_store %arg8[%c32_86, %c0_87], %94 {strides = array<i32>} : memref<36x256xf32, #tpu.memory_space<vmem>>, vector<4x256xf32>,
    %c0_88 = arith.constant 0 : index
    %c0_89 = arith.constant 0 : index
    %96 = vector.load %arg4[%c0_88, %c0_89] : memref<4x36xf32, #tpu.memory_space<vmem>>, vector<4x36xf32>
    %c0_90 = arith.constant 0 : index
    %c0_91 = arith.constant 0 : index
    %97 = vector.load %arg8[%c0_90, %c0_91] : memref<36x256xf32, #tpu.memory_space<vmem>>, vector<36x256xf32>
    %cst_92 = arith.constant dense<0.000000e+00> : vector<4x256xf32>
    %98 = tpu.matmul %96, %97, %cst_92 {dimension_numbers = #tpu.dot_dimension_numbers<[1], [0], [0], [1], [0, 0, 1, 1], [], []>} : vector<4x36xf32>, vector<36x256xf32>, vector<4x256xf32> -> vector<4x256xf32>
    %c0_93 = arith.constant 0 : index
    %c0_94 = arith.constant 0 : index
    %99 = vector.load %arg5[%c0_93, %c0_94] : memref<4x1xf32, #tpu.memory_space<vmem>>, vector<4x1xf32>
    %100 = vector.broadcast %99 : vector<4x1xf32> to vector<4x256xf32>
    %101 = arith.addf %98, %100 : vector<4x256xf32>
    %102 = arith.addf %101, %1 : vector<4x256xf32>
    %c0_95 = arith.constant 0 : index
    %c0_96 = arith.constant 0 : index
    %c0_97 = arith.constant 0 : index
    %103 = vector.load %arg6[%c0_95, %c0_96, %c0_97] : memref<1x4x256xf32, #tpu.memory_space<vmem>>, vector<1x4x256xf32>
    %104 = vector.shape_cast %103 : vector<1x4x256xf32> to vector<4x256xf32>
    %105 = vector.shape_cast %102 : vector<4x256xf32> to vector<1x4x256xf32>
    tpu.vector_store %arg6[%c0_95, %c0_96, %c0_97], %105 {strides = array<i32>} : memref<1x4x256xf32, #tpu.memory_space<vmem>>, vector<1x4x256xf32>,
    return
  }
  func.func @transform_0(%arg0: i32) -> (i32, i32, i32) {
    %c0_i32 = arith.constant 0 : i32
    %c0_i32_0 = arith.constant 0 : i32
    %c0_i32_1 = arith.constant 0 : i32
    return %arg0, %c0_i32, %c0_i32_0 : i32, i32, i32
  }
  func.func @transform_1(%arg0: i32) -> (i32, i32) {
    %c0_i32 = arith.constant 0 : i32
    %c0_i32_0 = arith.constant 0 : i32
    %c0_i32_1 = arith.constant 0 : i32
    return %c0_i32, %c0_i32_0 : i32, i32
  }
  func.func @transform_2(%arg0: i32) -> (i32, i32) {
    %c0_i32 = arith.constant 0 : i32
    %c0_i32_0 = arith.constant 0 : i32
    %c0_i32_1 = arith.constant 0 : i32
    return %c0_i32, %c0_i32_0 : i32, i32
  }
  func.func @transform_3(%arg0: i32) -> (i32, i32) {
    %c0_i32 = arith.constant 0 : i32
    %c0_i32_0 = arith.constant 0 : i32
    %c0_i32_1 = arith.constant 0 : i32
    return %c0_i32, %c0_i32_0 : i32, i32
  }
  func.func @transform_4(%arg0: i32) -> (i32, i32) {
    %c0_i32 = arith.constant 0 : i32
    %c0_i32_0 = arith.constant 0 : i32
    %c0_i32_1 = arith.constant 0 : i32
    return %c0_i32, %c0_i32_0 : i32, i32
  }
  func.func @transform_5(%arg0: i32) -> (i32, i32, i32) {
    %c0_i32 = arith.constant 0 : i32
    %c0_i32_0 = arith.constant 0 : i32
    %c0_i32_1 = arith.constant 0 : i32
    return %arg0, %c0_i32, %c0_i32_0 : i32, i32, i32
  }
}

</mosaic_0001>

<llo_original>
// kernel: tpu_custom_call.1
$region0: #{tpu_custom_call.1}
  #allocation0 [shape = 'u32[]', space=smem, size = 0x4, offset = 0x4, fixed_abs, tag = 'smem constant byte address 0x4 - core index']
  #allocation1 [shape = 'u32[144,128]{1,0:T(1,128)}', space=vmem, size = 0x12000, scoped, tag = 'internal scratch']
  #allocation2 [shape = 'f32[4,512]{1,0:T(4,128)}', space=vmem, size = 0x2000, scoped, tag = 'scratch operand']
  #allocation3 [shape = 'f32[36,256]{1,0:T(8,128)}', space=vmem, size = 0xa000, scoped, tag = 'scratch operand']
  %s0 = inlined_call_operand.hbm [shape: f32[2,4,256], index: 0, kind: input, shape index: {}]
  %s1 = inlined_call_operand.vmem [shape: f32[4,36], index: 1, kind: input, shape index: {}]
  %s2 = inlined_call_operand.vmem [shape: f32[4,1], index: 2, kind: input, shape index: {}]
  %s3 = inlined_call_operand.vmem [shape: f32[4,36], index: 3, kind: input, shape index: {}]
  %s4 = inlined_call_operand.vmem [shape: f32[4,1], index: 4, kind: input, shape index: {}]
  %s5 = inlined_call_operand.hbm [shape: f32[2,4,256], index: 5, kind: output, shape index: {}]
  %s6 = sld [smem:[#allocation0]]
  $region57: #{tpu_custom_call.1} parent=0
    _
  %s8 = ssub.s32 1, %s6
  %s9 = scalar_select 0, %s8, %s6
  $region1: #{tpu_custom_call.1} parent=0
    #allocation4 [shape = 'u8[8192]{0}', space=vmem, size = 0x2000, scoped, tag = 'input window, operand 0']
    #allocation5 [shape = 's32[2]{0}', space=sflag, size = 0x8, scoped, tag = 'scoped memory for tpu_custom_call.1']
    #allocation6 [shape = 's32[2]{0}', space=sflag, size = 0x8, scoped, tag = 'scoped memory for tpu_custom_call.1']
    #allocation7 [shape = 'u8[8192]{0}', space=vmem, size = 0x2000, scoped, tag = 'output window, operand 0']
    %10 = vsyncpa [#allocation5], 0
    %s11 = scalar_lea.sflag [#allocation5], 1
    %12 = vsyncpa %s11, 0
    %13 = vsyncpa [#allocation6], 0
    %s14 = scalar_lea.sflag [#allocation6], 1
    %15 = vsyncpa %s14, 0
    loop: start=0, step=1, limit=4
    $region2: #{tpu_custom_call.1} parent=1 // loop_pre_header
      _
    $region3: #{tpu_custom_call.1} parent=1 // loop_header
      %s17 = sphi 0, %s21
      %p18 = scmp.ge.s32.totalorder %s17, 4
      %s27 = sphi 0, %s29
      %s30 = sphi 0, %s27
      %s31 = sphi 0, %s30
      %s47 = sphi 0, %s31
      %s51 = sphi 0, %s51
      %s53 = sphi 0, %s51
      %s54 = sphi 0, %s53
      %s68 = sphi 0, %s54
      %s72 = sphi 0, %s72
      %s74 = sphi 0, %s72
      %s75 = sphi 0, %s74
      %s89 = sphi 0, %s75
      %s93 = sphi 0, %s93
      %s95 = sphi 0, %s93
      %s96 = sphi 0, %s95
      %s110 = sphi 0, %s96
      %s114 = sphi 0, %s114
      %s116 = sphi 0, %s114
      %s117 = sphi 0, %s116
      %s131 = sphi 0, %s117
      %s137 = sphi 0, %s139
      %s140 = sphi 0, %s137
      %s141 = sphi 0, %s140
      %s157 = sphi 0, %s141
    $region4: #{tpu_custom_call.1} parent=1 // loop_header_branch
      %20 = sbr.rel (%p18) target = $region8
    $region5: #{tpu_custom_call.1} parent=1 // loop_body
      %s22 = ssub.s32 %s17, 1
      %s23 = ssub.s32 %s17, 2
      %s24 = sadd.s32 %s17, 1
      %s25 = ssub.s32 %s17, %s24
      %p26 = scmp.eq.s32.totalorder %s25, 0
      %s28 = sadd.s32 %s27, 1
      %s29 = scalar_select %p26, %s27, %s28
      %p32 = pneg %p26
      %p33 = scmp.eq.s32.totalorder %s17, 1
      %p34 = por %p32, %p33
      %p35 = scmp.ne.s32.totalorder %s27, %s30
      %p36 = scmp.eq.s32.totalorder %s17, 0
      %p37 = por %p35, %p36
      %p38 = scmp.ne.s32.totalorder %s27, %s30
      %p39 = scmp.eq.s32.totalorder %s22, 1
      %p40 = por %p38, %p39
      %p41 = scmp.ne.s32.totalorder %s30, %s31
      %p42 = scmp.eq.s32.totalorder %s22, 0
      %p43 = por %p41, %p42
      %p44 = scmp.ne.s32.totalorder %s30, %s31
      %p45 = scmp.eq.s32.totalorder %s23, 1
      %p46 = por %p44, %p45
      %p48 = scmp.ne.s32.totalorder %s31, %s47
      %p49 = scmp.eq.s32.totalorder %s23, 0
      %p50 = por %p48, %p49
      %s52 = sadd.s32 %s51, 1
      %p55 = scmp.eq.s32.totalorder %s17, 1
      %p56 = scmp.ne.s32.totalorder %s51, %s53
      %p57 = scmp.eq.s32.totalorder %s17, 0
      %p58 = por %p56, %p57
      %p59 = scmp.ne.s32.totalorder %s51, %s53
      %p60 = scmp.eq.s32.totalorder %s22, 1
      %p61 = por %p59, %p60
      %p62 = scmp.ne.s32.totalorder %s53, %s54
      %p63 = scmp.eq.s32.totalorder %s22, 0
      %p64 = por %p62, %p63
      %p65 = scmp.ne.s32.totalorder %s53, %s54
      %p66 = scmp.eq.s32.totalorder %s23, 1
      %p67 = por %p65, %p66
      %p69 = scmp.ne.s32.totalorder %s54, %s68
      %p70 = scmp.eq.s32.totalorder %s23, 0
      %p71 = por %p69, %p70
      %s73 = sadd.s32 %s72, 1
      %p76 = scmp.eq.s32.totalorder %s17, 1
      %p77 = scmp.ne.s32.totalorder %s72, %s74
      %p78 = scmp.eq.s32.totalorder %s17, 0
      %p79 = por %p77, %p78
      %p80 = scmp.ne.s32.totalorder %s72, %s74
      %p81 = scmp.eq.s32.totalorder %s22, 1
      %p82 = por %p80, %p81
      %p83 = scmp.ne.s32.totalorder %s74, %s75
      %p84 = scmp.eq.s32.totalorder %s22, 0
      %p85 = por %p83, %p84
      %p86 = scmp.ne.s32.totalorder %s74, %s75
      %p87 = scmp.eq.s32.totalorder %s23, 1
      %p88 = por %p86, %p87
      %p90 = scmp.ne.s32.totalorder %s75, %s89
      %p91 = scmp.eq.s32.totalorder %s23, 0
      %p92 = por %p90, %p91
      %s94 = sadd.s32 %s93, 1
      %p97 = scmp.eq.s32.totalorder %s17, 1
      %p98 = scmp.ne.s32.totalorder %s93, %s95
      %p99 = scmp.eq.s32.totalorder %s17, 0
      %p100 = por %p98, %p99
      %p101 = scmp.ne.s32.totalorder %s93, %s95
      %p102 = scmp.eq.s32.totalorder %s22, 1
      %p103 = por %p101, %p102
      %p104 = scmp.ne.s32.totalorder %s95, %s96
      %p105 = scmp.eq.s32.totalorder %s22, 0
      %p106 = por %p104, %p105
      %p107 = scmp.ne.s32.totalorder %s95, %s96
      %p108 = scmp.eq.s32.totalorder %s23, 1
      %p109 = por %p107, %p108
      %p111 = scmp.ne.s32.totalorder %s96, %s110
      %p112 = scmp.eq.s32.totalorder %s23, 0
      %p113 = por %p111, %p112
      %s115 = sadd.s32 %s114, 1
      %p118 = scmp.eq.s32.totalorder %s17, 1
      %p119 = scmp.ne.s32.totalorder %s114, %s116
      %p120 = scmp.eq.s32.totalorder %s17, 0
      %p121 = por %p119, %p120
      %p122 = scmp.ne.s32.totalorder %s114, %s116
      %p123 = scmp.eq.s32.totalorder %s22, 1
      %p124 = por %p122, %p123
      %p125 = scmp.ne.s32.totalorder %s116, %s117
      %p126 = scmp.eq.s32.totalorder %s22, 0
      %p127 = por %p125, %p126
      %p128 = scmp.ne.s32.totalorder %s116, %s117
      %p129 = scmp.eq.s32.totalorder %s23, 1
      %p130 = por %p128, %p129
      %p132 = scmp.ne.s32.totalorder %s117, %s131
      %p133 = scmp.eq.s32.totalorder %s23, 0
      %p134 = por %p132, %p133
      %s135 = ssub.s32 %s17, %s24
      %p136 = scmp.eq.s32.totalorder %s135, 0
      %s138 = sadd.s32 %s137, 1
      %s139 = scalar_select %p136, %s137, %s138
      %p142 = pneg %p136
      %p143 = scmp.eq.s32.totalorder %s17, 1
      %p144 = por %p142, %p143
      %p145 = scmp.ne.s32.totalorder %s137, %s140
      %p146 = scmp.eq.s32.totalorder %s17, 0
      %p147 = por %p145, %p146
      %p148 = scmp.ne.s32.totalorder %s137, %s140
      %p149 = scmp.eq.s32.totalorder %s22, 1
      %p150 = por %p148, %p149
      %p151 = scmp.ne.s32.totalorder %s140, %s141
      %p152 = scmp.eq.s32.totalorder %s22, 0
      %p153 = por %p151, %p152
      %p154 = scmp.ne.s32.totalorder %s140, %s141
      %p155 = scmp.eq.s32.totalorder %s23, 1
      %p156 = por %p154, %p155
      %p158 = scmp.ne.s32.totalorder %s141, %s157
      %p159 = scmp.eq.s32.totalorder %s23, 0
      %p160 = por %p158, %p159
      %p161 = scmp.le.s32.totalorder 1, %s17
      %p162 = scmp.lt.s32.totalorder %s17, 3
      %p163 = pnand %p161, %p162
      %p164 = pneg %p163
      // Predicated region
      $region9: #{tpu_custom_call.1} parent=5 // pred_check
        _
      $region10: #{tpu_custom_call.1} parent=5 // pred_check_branch
        %166 = sbr.rel (%p163) target = $region12
      $region11: #{tpu_custom_call.1} parent=5 // pred_region
        %s167 = ssub.s32 %s17, 1
        // Predicated region
        $region13: #{tpu_custom_call.1} parent=11 // pred_check
          %p168 = pneg %p64
        $region14: #{tpu_custom_call.1} parent=11 // pred_check_branch
          %170 = sbr.rel (%p168) target = $region16
        $region15: #{tpu_custom_call.1} parent=11 // pred_region
          _
        $region16: #{tpu_custom_call.1} parent=11 // pred_fallthru
          _
        // Predicated region
        $region17: #{tpu_custom_call.1} parent=11 // pred_check
          %p171 = pneg %p85
        $region18: #{tpu_custom_call.1} parent=11 // pred_check_branch
          %173 = sbr.rel (%p171) target = $region20
        $region19: #{tpu_custom_call.1} parent=11 // pred_region
          _
        $region20: #{tpu_custom_call.1} parent=11 // pred_fallthru
          _
        // Predicated region
        $region21: #{tpu_custom_call.1} parent=11 // pred_check
          %p174 = pneg %p106
        $region22: #{tpu_custom_call.1} parent=11 // pred_check_branch
          %176 = sbr.rel (%p174) target = $region24
        $region23: #{tpu_custom_call.1} parent=11 // pred_region
          _
        $region24: #{tpu_custom_call.1} parent=11 // pred_fallthru
          _
        // Predicated region
        $region25: #{tpu_custom_call.1} parent=11 // pred_check
          %p177 = pneg %p127
        $region26: #{tpu_custom_call.1} parent=11 // pred_check_branch
          %179 = sbr.rel (%p177) target = $region28
        $region27: #{tpu_custom_call.1} parent=11 // pred_region
          _
        $region28: #{tpu_custom_call.1} parent=11 // pred_fallthru
          _
      $region12: #{tpu_custom_call.1} parent=5 // pred_fallthru
        _
      %p180 = scmp.lt.s32.totalorder %s17, 2
      // Predicated region
      $region29: #{tpu_custom_call.1} parent=5 // pred_check
        %p181 = pneg %p180
      $region30: #{tpu_custom_call.1} parent=5 // pred_check_branch
        %183 = sbr.rel (%p181) target = $region32
      $region31: #{tpu_custom_call.1} parent=5 // pred_region
        // Predicated region
        $region33: #{tpu_custom_call.1} parent=31 // pred_check
          %p184 = pneg %p37
        $region34: #{tpu_custom_call.1} parent=31 // pred_check_branch
          %186 = sbr.rel (%p184) target = $region36
        $region35: #{tpu_custom_call.1} parent=31 // pred_region
          %s187 = sand.u32 %s27, 1
          %s188 = scalar_lea.sflag [#allocation5], %s187
          %s189 = sand.u32 %s27, 1
          %s190 = smul.addr %s189, 8
          %s191 = scalar_lea.vmem [#allocation4], %s190
          %s193 = ssub.s32 128, 128
          %194 = vsyncadd %s188, %s193
          %s195 = smul.addr %s17, 2
          %s196 = smul.addr %s195, 64
          %s197 = scalar_lea.hbm %s0, %s196
          %s199 = sshll.u32 %s191, 4
          %s200 = int_to_ptr.vmem [resolvable:$true] %s199
          %202 = dma.hbm_to_vmem [thread:$0]  %s197, 128, %s200, %s188
        $region36: #{tpu_custom_call.1} parent=31 // pred_fallthru
          _
      $region32: #{tpu_custom_call.1} parent=5 // pred_fallthru
        _
      %p203 = scmp.le.s32.totalorder 1, %s17
      %p204 = scmp.lt.s32.totalorder %s17, 3
      %p205 = pnand %p203, %p204
      %p206 = pneg %p205
      // Predicated region
      $region37: #{tpu_custom_call.1} parent=5 // pred_check
        _
      $region38: #{tpu_custom_call.1} parent=5 // pred_check_branch
        %208 = sbr.rel (%p205) target = $region40
      $region39: #{tpu_custom_call.1} parent=5 // pred_region
        %s209 = ssub.s32 %s17, 1
        %s210 = sand.u32 %s30, 1
        %s211 = scalar_lea.sflag [#allocation5], %s210
        %s212 = sand.u32 %s30, 1
        %s213 = smul.addr %s212, 8
        %s214 = scalar_lea.vmem [#allocation4], %s213
        // Predicated region
        $region41: #{tpu_custom_call.1} parent=39 // pred_check
          %p215 = pneg %p43
        $region42: #{tpu_custom_call.1} parent=39 // pred_check_branch
          %217 = sbr.rel (%p215) target = $region44
        $region43: #{tpu_custom_call.1} parent=39 // pred_region
          %218 = dma.done %s211, 128
        $region44: #{tpu_custom_call.1} parent=39 // pred_fallthru
          _
        %s219 = sand.u32 %s30, 1
        %s220 = scalar_lea.sflag [#allocation5], %s219
        %s221 = sand.u32 %s30, 1
        %s222 = smul.addr %s221, 8
        %s223 = scalar_lea.vmem [#allocation4], %s222
        %p224 = pneg %p43
        %p225 = pneg %p40
        %p226 = pneg %p64
        %p227 = pneg %p61
        %p228 = pneg %p85
        %p229 = pneg %p82
        %p230 = pneg %p106
        %p231 = pneg %p103
        %p232 = pneg %p127
        %p233 = pneg %p124
        %p234 = pneg %p153
        %p235 = pneg %p150
        %s236 = sand.u32 %s140, 1
        %s237 = scalar_lea.sflag [#allocation6], %s236
        %s238 = sand.u32 %s140, 1
        %s239 = smul.addr %s238, 8
        %s240 = scalar_lea.vmem [#allocation7], %s239
        %v241 = vld [vmem:[%s214] sm:$0xff]
        %242 = vst [vmem:[#allocation2] sm:$0xf] 0.0
        %243 = vst [vmem:[#allocation2 + $0xc] sm:$0xf] 0.0
        %v244 = vlaneseq
        %v245 = vand.u32 %v244, 127
        %v246 = vadd.s32 %v245, 128
        %vm247 = vcmp.lt.s32.totalorder %v245, 0
        %v248 = vsub.s32 0, %v245
        %v249 = vsel %vm247, %v248, %v245
        %v250 = vshrl.u32 %v249, 4
        %v251 = vand.u32 %v249, 15
        %v252 = vsub.s32 0, %v251
        %v253 = vsel %vm247, %v252, %v251
        %vm254 = vcmp.lt.s32.totalorder %v246, 0
        %v255 = vsub.s32 0, %v246
        %v256 = vsel %vm254, %v255, %v246
        %v257 = vshrl.u32 %v256, 4
        %v258 = vand.u32 %v256, 15
        %v259 = vsub.s32 0, %v258
        %v260 = vsel %vm254, %v259, %v258
        %vm261 = vcmp.ne.s32.totalorder %v253, 0
        %vm262 = vcmp.ne.s32.totalorder %v260, 0
        %vm263 = vcmp.lt.s32.totalorder %v253, 0
        %vm264 = vcmp.lt.s32.totalorder %v260, 0
        %vm265 = vmand %vm263, %vm261
        %vm266 = vmand %vm264, %vm262
        %v267 = vadd.s32 %v253, 16
        %v268 = vadd.s32 %v260, 16
        %v269 = vsel %vm265, %v267, %v253
        %v270 = vsel %vm266, %v268, %v260
        %vm271 = vcmp.ge.s32.totalorder %v269, 1
        %vm272 = vcmp.ge.s32.totalorder %v270, 1
        %vm273 = vcmp.lt.s32.totalorder %v269, 15
        %vm274 = vcmp.lt.s32.totalorder %v270, 15
        %275 = vst [vmem:[#allocation2 + $0x4] sm:$0xff] %v241
        %v276 = vld [vmem:[#allocation2] sm:$0xff]
        %v277 = vld [vmem:[#allocation2 + $0x8] sm:$0xf]
        %v280 = vcombine.high %v276, %v276
        %281 = vrot.lane.b32.xlu0 %v276, 17
        %v282 = vpop.permute.xlu0 %281
        %283 = vrot.lane.b32.xlu0 %v280, 17
        %v284 = vpop.permute.xlu0 %283
        %285 = vrot.lane.b32.xlu0 %v277, 17
        %v286 = vpop.permute.xlu0 %285
        %vm287 = vcmask 138240
        %v288 = vsel %vm287, %v282, %v284
        %v289 = vsel %vm287, %v284, %v286
        %v292 = vsel %vm271, %v288, 0.0
        %v293 = vsel %vm272, %v289, 0.0
        %294 = vst [vmem:[#allocation3] sm:$0xf] %v292
        %295 = vst [vmem:[#allocation3 + $0x8] sm:$0xf] %v293
        %v296 = vld [vmem:[#allocation2] sm:$0xff]
        %v297 = vld [vmem:[#allocation2 + $0x8] sm:$0xf]
        %v300 = vcombine.low %v296, %v296
        %v301 = vcombine.low %v297, %v297
        %302 = vrot.lane.b32.xlu0 %v300, 16
        %v303 = vpop.permute.xlu0 %302
        %304 = vrot.lane.b32.xlu0 %v296, 16
        %v305 = vpop.permute.xlu0 %304
        %306 = vrot.lane.b32.xlu0 %v301, 16
        %v307 = vpop.permute.xlu0 %306
        %vm308 = vcmask 130048
        %v309 = vsel %vm308, %v303, %v305
        %v310 = vsel %vm308, %v305, %v307
        %313 = vst [vmem:[#allocation3] sm:$0xf0] %v309
        %314 = vst [vmem:[#allocation3 + $0x8] sm:$0xf0] %v310
        %v315 = vld [vmem:[#allocation2] sm:$0xff]
        %v316 = vld [vmem:[#allocation2 + $0x8] sm:$0xf]
        %v319 = vcombine.high %v315, %v315
        %320 = vrot.lane.b32.xlu0 %v315, 15
        %v321 = vpop.permute.xlu0 %320
        %322 = vrot.lane.b32.xlu0 %v319, 15
        %v323 = vpop.permute.xlu0 %322
        %324 = vrot.lane.b32.xlu0 %v316, 15
        %v325 = vpop.permute.xlu0 %324
        %vm326 = vcmask 121856
        %v327 = vsel %vm326, %v321, %v323
        %v328 = vsel %vm326, %v323, %v325
        %v331 = vsel %vm273, %v327, 0.0
        %v332 = vsel %vm274, %v328, 0.0
        %333 = vst [vmem:[#allocation3 + $0x10] sm:$0xf] %v331
        %334 = vst [vmem:[#allocation3 + $0x18] sm:$0xf] %v332
        %v335 = vld [vmem:[#allocation2] sm:$0xff]
        %v336 = vld [vmem:[#allocation2 + $0x8] sm:$0xf]
        %v339 = vcombine.high %v335, %v335
        %340 = vrot.lane.b32.xlu0 %v335, 1
        %v341 = vpop.permute.xlu0 %340
        %342 = vrot.lane.b32.xlu0 %v339, 1
        %v343 = vpop.permute.xlu0 %342
        %344 = vrot.lane.b32.xlu0 %v336, 1
        %v345 = vpop.permute.xlu0 %344
        %vm346 = vcmask 7168
        %v347 = vsel %vm346, %v341, %v343
        %v348 = vsel %vm346, %v343, %v345
        %v351 = vsel %vm271, %v347, 0.0
        %v352 = vsel %vm272, %v348, 0.0
        %v355 = vrot.slane %v351, 4
        %v356 = vrot.slane %v352, 4
        %359 = vst [vmem:[#allocation3 + $0x10] sm:$0xf0] %v355
        %360 = vst [vmem:[#allocation3 + $0x18] sm:$0xf0] %v356
        %v361 = vld [vmem:[#allocation2 + $0x4] sm:$0xff]
        %v363 = vcombine.high %v361, %v361
        %365 = vst [vmem:[#allocation3 + $0x20] sm:$0xf] %v361
        %366 = vst [vmem:[#allocation3 + $0x28] sm:$0xf] %v363
        %v367 = vld [vmem:[#allocation2 + $0x4] sm:$0xff]
        %v368 = vld [vmem:[#allocation2 + $0xc] sm:$0xf]
        %v371 = vcombine.high %v367, %v367
        %372 = vrot.lane.b32.xlu0 %v367, 127
        %v373 = vpop.permute.xlu0 %372
        %374 = vrot.lane.b32.xlu0 %v371, 127
        %v375 = vpop.permute.xlu0 %374
        %376 = vrot.lane.b32.xlu0 %v368, 127
        %v377 = vpop.permute.xlu0 %376
        %vm378 = vcmask 1039360
        %v379 = vsel %vm378, %v373, %v375
        %v380 = vsel %vm378, %v375, %v377
        %v383 = vsel %vm273, %v379, 0.0
        %v384 = vsel %vm274, %v380, 0.0
        %v387 = vrot.slane %v383, 4
        %v388 = vrot.slane %v384, 4
        %391 = vst [vmem:[#allocation3 + $0x20] sm:$0xf0] %v387
        %392 = vst [vmem:[#allocation3 + $0x28] sm:$0xf0] %v388
        %v393 = vld [vmem:[#allocation2 + $0x4] sm:$0xff]
        %v394 = vld [vmem:[#allocation2 + $0xc] sm:$0xf]
        %v397 = vcombine.high %v393, %v393
        %398 = vrot.lane.b32.xlu0 %v393, 113
        %v399 = vpop.permute.xlu0 %398
        %400 = vrot.lane.b32.xlu0 %v397, 113
        %v401 = vpop.permute.xlu0 %400
        %402 = vrot.lane.b32.xlu0 %v394, 113
        %v403 = vpop.permute.xlu0 %402
        %vm404 = vcmask 924672
        %v405 = vsel %vm404, %v399, %v401
        %v406 = vsel %vm404, %v401, %v403
        %v409 = vsel %vm271, %v405, 0.0
        %v410 = vsel %vm272, %v406, 0.0
        %411 = vst [vmem:[#allocation3 + $0x30] sm:$0xf] %v409
        %412 = vst [vmem:[#allocation3 + $0x38] sm:$0xf] %v410
        %v413 = vld [vmem:[#allocation2 + $0x4] sm:$0xff]
        %v414 = vld [vmem:[#allocation2 + $0xc] sm:$0xf]
        %v417 = vcombine.low %v413, %v413
        %v418 = vcombine.low %v414, %v414
        %419 = vrot.lane.b32.xlu0 %v417, 112
        %v420 = vpop.permute.xlu0 %419
        %421 = vrot.lane.b32.xlu0 %v413, 112
        %v422 = vpop.permute.xlu0 %421
        %423 = vrot.lane.b32.xlu0 %v418, 112
        %v424 = vpop.permute.xlu0 %423
        %vm425 = vcmask 916480
        %v426 = vsel %vm425, %v420, %v422
        %v427 = vsel %vm425, %v422, %v424
        %430 = vst [vmem:[#allocation3 + $0x30] sm:$0xf0] %v426
        %431 = vst [vmem:[#allocation3 + $0x38] sm:$0xf0] %v427
        %v432 = vld [vmem:[#allocation2 + $0x4] sm:$0xff]
        %v433 = vld [vmem:[#allocation2 + $0xc] sm:$0xf]
        %v436 = vcombine.high %v432, %v432
        %437 = vrot.lane.b32.xlu0 %v432, 111
        %v438 = vpop.permute.xlu0 %437
        %439 = vrot.lane.b32.xlu0 %v436, 111
        %v440 = vpop.permute.xlu0 %439
        %441 = vrot.lane.b32.xlu0 %v433, 111
        %v442 = vpop.permute.xlu0 %441
        %vm443 = vcmask 908288
        %v444 = vsel %vm443, %v438, %v440
        %v445 = vsel %vm443, %v440, %v442
        %v448 = vsel %vm273, %v444, 0.0
        %v449 = vsel %vm274, %v445, 0.0
        %450 = vst [vmem:[#allocation3 + $0x40] sm:$0xf] %v448
        %451 = vst [vmem:[#allocation3 + $0x48] sm:$0xf] %v449
        %v452 = vld [vmem:[%s1] sm:$0xf]
        %v453 = vld [vmem:[#allocation3] sm:$0xff]
        %v454 = vld [vmem:[#allocation3 + $0x8] sm:$0xff]
        %v455 = vld [vmem:[#allocation3 + $0x10] sm:$0xff]
        %v456 = vld [vmem:[#allocation3 + $0x18] sm:$0xff]
        %v457 = vld [vmem:[#allocation3 + $0x20] sm:$0xff]
        %v458 = vld [vmem:[#allocation3 + $0x28] sm:$0xff]
        %v459 = vld [vmem:[#allocation3 + $0x30] sm:$0xff]
        %v460 = vld [vmem:[#allocation3 + $0x38] sm:$0xff]
        %v461 = vld [vmem:[#allocation3 + $0x40] sm:$0xf]
        %v462 = vld [vmem:[#allocation3 + $0x48] sm:$0xf]
        %v463 = vld [vmem:[%s2] sm:$0xf]
        %465 = vset.pattern.permute.xlu0 0
        %466 = vperm.xlu0 %465, %v463
        %v467 = vpop.permute.xlu0 %466
        %vm469 = vcmask 293888
        %v471 = vsel %vm469, %v452, 0
        %vm473 = vcmask 1043456
        %v475 = vsel %vm473, %v461, 0
        %v478 = vsel %vm473, %v462, 0
        %480 = vmatprep.subr.mxu0 %v454
        %481 = vmatpush1.msra.mxu0 %v453
        %482 = vmatprep.subr.mxu0 %v456
        %483 = vmatpush1.msra.mxu0 %v455
        %484 = vmatprep.subr.mxu0 %v458
        %485 = vmatpush1.msra.mxu0 %v457
        %486 = vmatprep.subr.mxu0 %v460
        %487 = vmatpush1.msra.mxu0 %v459
        %488 = vmatprep.subr.mxu0 %v478
        %489 = vmatpush1.msra.mxu0 %v475
        %490 = vmatprep.subr.mxu0 0.0
        %491 = vmatpush1.msra.mxu0 0.0
        %492 = vmatprep.subr.mxu0 0.0
        %493 = vmatpush1.msra.mxu0 0.0
        %494 = vmatprep.subr.mxu0 0.0
        %495 = vmatpush1.msra.mxu0 0.0
        %496 = vmatprep.subr.mxu0 0.0
        %497 = vmatpush1.msra.mxu0 0.0
        %498 = vmatprep.subr.mxu0 0.0
        %499 = vmatpush1.msra.mxu0 0.0
        %500 = vmatprep.subr.mxu0 0.0
        %501 = vmatpush1.msra.mxu0 0.0
        %502 = vmatprep.subr.mxu0 0.0
        %503 = vmatpush1.msra.mxu0 0.0
        %504 = vmatprep.subr.mxu0 0.0
        %505 = vmatpush1.msra.mxu0 0.0
        %506 = vmatprep.subr.mxu0 0.0
        %507 = vmatpush1.msra.mxu0 0.0
        %508 = vmatprep.subr.mxu0 0.0
        %509 = vmatpush1.msra.mxu0 0.0
        %510 = vmatprep.subr.mxu0 0.0
        %511 = vmatpush1.msra.mxu0 0.0
        %512 = vmatprep.subr.mxu0 0.0
        %513 = vmatpush1.msra.mxu0 0.0
        %514 = vmatprep.subr.mxu0 0.0
        %515 = vmatpush1.msra.mxu0 0.0
        %516 = vmatprep.subr.mxu0 0.0
        %517 = vmatpush1.msra.mxu0 0.0
        %518 = vmatprep.subr.mxu0 0.0
        %519 = vmatpush1.msra.mxu0 0.0
        %520 = vmatprep.subr.mxu0 0.0
        %521 = vmatpush1.msra.mxu0 0.0
        %522 = vmatprep.subr.mxu0 0.0
        %523 = vmatpush1.msra.mxu0 0.0
        %524 = vmatprep.subr.mxu0 0.0
        %525 = vmatpush1.msra.mxu0 0.0
        %526 = vmatprep.subr.mxu0 0.0
        %527 = vmatpush1.msra.mxu0 0.0
        %528 = vmatprep.subr.mxu0 0.0
        %529 = vmatpush1.msra.mxu0 0.0
        %530 = vmatprep.subr.mxu0 0.0
        %531 = vmatpush1.msra.mxu0 0.0
        %532 = vmatprep.subr.mxu0 0.0
        %533 = vmatpush1.msra.mxu0 0.0
        %534 = vmatprep.subr.mxu0 0.0
        %535 = vmatpush1.msra.mxu0 0.0
        %536 = vmatprep.subr.mxu0 0.0
        %537 = vmatpush1.msra.mxu0 0.0
        %538 = vmatprep.subr.mxu0 0.0
        %539 = vmatpush1.msra.mxu0 0.0
        %540 = vmatprep.subr.mxu0 0.0
        %541 = vmatpush1.msra.mxu0 0.0
        %542 = vmatprep.subr.mxu0 0.0
        %543 = vmatpush1.msra.mxu0 0.0
        %544 = vmatprep.mubr.f32.mxu0 0.0
        %545 = vmatmul.mubr.f32.gmra.mrb[0].mxu0 %v471
        %v546 = vpop.f32.mrb[0].mxu0
        %v547 = vadd.f32 %v467, %v546
        %v548 = vpop.f32.mrb[0].mxu0
        %v549 = vadd.f32 %v467, %v548
        %550 = vdwg.mxu0
        %v551 = vmax.f32 %v547, 0.0
        %v552 = vmax.f32 %v549, 0.0
        %v555 = vcombine.low %v551, %v552
        %557 = vst [vmem:[#allocation2 + $0x4] sm:$0xff] %v555
        %v558 = vld [vmem:[#allocation2] sm:$0xff]
        %v559 = vld [vmem:[#allocation2 + $0x8] sm:$0xf]
        %v562 = vcombine.high %v558, %v558
        %563 = vrot.lane.b32.xlu0 %v558, 17
        %v564 = vpop.permute.xlu0 %563
        %565 = vrot.lane.b32.xlu0 %v562, 17
        %v566 = vpop.permute.xlu0 %565
        %567 = vrot.lane.b32.xlu0 %v559, 17
        %v568 = vpop.permute.xlu0 %567
        %v569 = vsel %vm287, %v564, %v566
        %v570 = vsel %vm287, %v566, %v568
        %v573 = vsel %vm271, %v569, 0.0
        %v574 = vsel %vm272, %v570, 0.0
        %575 = vst [vmem:[#allocation3] sm:$0xf] %v573
        %576 = vst [vmem:[#allocation3 + $0x8] sm:$0xf] %v574
        %v577 = vld [vmem:[#allocation2] sm:$0xff]
        %v578 = vld [vmem:[#allocation2 + $0x8] sm:$0xf]
        %v581 = vcombine.low %v577, %v577
        %v582 = vcombine.low %v578, %v578
        %583 = vrot.lane.b32.xlu0 %v581, 16
        %v584 = vpop.permute.xlu0 %583
        %585 = vrot.lane.b32.xlu0 %v577, 16
        %v586 = vpop.permute.xlu0 %585
        %587 = vrot.lane.b32.xlu0 %v582, 16
        %v588 = vpop.permute.xlu0 %587
        %v589 = vsel %vm308, %v584, %v586
        %v590 = vsel %vm308, %v586, %v588
        %593 = vst [vmem:[#allocation3] sm:$0xf0] %v589
        %594 = vst [vmem:[#allocation3 + $0x8] sm:$0xf0] %v590
        %v595 = vld [vmem:[#allocation2] sm:$0xff]
        %v596 = vld [vmem:[#allocation2 + $0x8] sm:$0xf]
        %v599 = vcombine.high %v595, %v595
        %600 = vrot.lane.b32.xlu0 %v595, 15
        %v601 = vpop.permute.xlu0 %600
        %602 = vrot.lane.b32.xlu0 %v599, 15
        %v603 = vpop.permute.xlu0 %602
        %604 = vrot.lane.b32.xlu0 %v596, 15
        %v605 = vpop.permute.xlu0 %604
        %v606 = vsel %vm326, %v601, %v603
        %v607 = vsel %vm326, %v603, %v605
        %v610 = vsel %vm273, %v606, 0.0
        %v611 = vsel %vm274, %v607, 0.0
        %612 = vst [vmem:[#allocation3 + $0x10] sm:$0xf] %v610
        %613 = vst [vmem:[#allocation3 + $0x18] sm:$0xf] %v611
        %v614 = vld [vmem:[#allocation2] sm:$0xff]
        %v615 = vld [vmem:[#allocation2 + $0x8] sm:$0xf]
        %v618 = vcombine.high %v614, %v614
        %619 = vrot.lane.b32.xlu0 %v614, 1
        %v620 = vpop.permute.xlu0 %619
        %621 = vrot.lane.b32.xlu0 %v618, 1
        %v622 = vpop.permute.xlu0 %621
        %623 = vrot.lane.b32.xlu0 %v615, 1
        %v624 = vpop.permute.xlu0 %623
        %v625 = vsel %vm346, %v620, %v622
        %v626 = vsel %vm346, %v622, %v624
        %v629 = vsel %vm271, %v625, 0.0
        %v630 = vsel %vm272, %v626, 0.0
        %v633 = vrot.slane %v629, 4
        %v634 = vrot.slane %v630, 4
        %637 = vst [vmem:[#allocation3 + $0x10] sm:$0xf0] %v633
        %638 = vst [vmem:[#allocation3 + $0x18] sm:$0xf0] %v634
        %v639 = vld [vmem:[#allocation2 + $0x4] sm:$0xff]
        %v641 = vcombine.high %v639, %v639
        %643 = vst [vmem:[#allocation3 + $0x20] sm:$0xf] %v639
        %644 = vst [vmem:[#allocation3 + $0x28] sm:$0xf] %v641
        %v645 = vld [vmem:[#allocation2 + $0x4] sm:$0xff]
        %v646 = vld [vmem:[#allocation2 + $0xc] sm:$0xf]
        %v649 = vcombine.high %v645, %v645
        %650 = vrot.lane.b32.xlu0 %v645, 127
        %v651 = vpop.permute.xlu0 %650
        %652 = vrot.lane.b32.xlu0 %v649, 127
        %v653 = vpop.permute.xlu0 %652
        %654 = vrot.lane.b32.xlu0 %v646, 127
        %v655 = vpop.permute.xlu0 %654
        %v656 = vsel %vm378, %v651, %v653
        %v657 = vsel %vm378, %v653, %v655
        %v660 = vsel %vm273, %v656, 0.0
        %v661 = vsel %vm274, %v657, 0.0
        %v664 = vrot.slane %v660, 4
        %v665 = vrot.slane %v661, 4
        %668 = vst [vmem:[#allocation3 + $0x20] sm:$0xf0] %v664
        %669 = vst [vmem:[#allocation3 + $0x28] sm:$0xf0] %v665
        %v670 = vld [vmem:[#allocation2 + $0x4] sm:$0xff]
        %v671 = vld [vmem:[#allocation2 + $0xc] sm:$0xf]
        %v674 = vcombine.high %v670, %v670
        %675 = vrot.lane.b32.xlu0 %v670, 113
        %v676 = vpop.permute.xlu0 %675
        %677 = vrot.lane.b32.xlu0 %v674, 113
        %v678 = vpop.permute.xlu0 %677
        %679 = vrot.lane.b32.xlu0 %v671, 113
        %v680 = vpop.permute.xlu0 %679
        %v681 = vsel %vm404, %v676, %v678
        %v682 = vsel %vm404, %v678, %v680
        %v685 = vsel %vm271, %v681, 0.0
        %v686 = vsel %vm272, %v682, 0.0
        %687 = vst [vmem:[#allocation3 + $0x30] sm:$0xf] %v685
        %688 = vst [vmem:[#allocation3 + $0x38] sm:$0xf] %v686
        %v689 = vld [vmem:[#allocation2 + $0x4] sm:$0xff]
        %v690 = vld [vmem:[#allocation2 + $0xc] sm:$0xf]
        %v693 = vcombine.low %v689, %v689
        %v694 = vcombine.low %v690, %v690
        %695 = vrot.lane.b32.xlu0 %v693, 112
        %v696 = vpop.permute.xlu0 %695
        %697 = vrot.lane.b32.xlu0 %v689, 112
        %v698 = vpop.permute.xlu0 %697
        %699 = vrot.lane.b32.xlu0 %v694, 112
        %v700 = vpop.permute.xlu0 %699
        %v701 = vsel %vm425, %v696, %v698
        %v702 = vsel %vm425, %v698, %v700
        %705 = vst [vmem:[#allocation3 + $0x30] sm:$0xf0] %v701
        %706 = vst [vmem:[#allocation3 + $0x38] sm:$0xf0] %v702
        %v707 = vld [vmem:[#allocation2 + $0x4] sm:$0xff]
        %v708 = vld [vmem:[#allocation2 + $0xc] sm:$0xf]
        %v711 = vcombine.high %v707, %v707
        %712 = vrot.lane.b32.xlu0 %v707, 111
        %v713 = vpop.permute.xlu0 %712
        %714 = vrot.lane.b32.xlu0 %v711, 111
        %v715 = vpop.permute.xlu0 %714
        %716 = vrot.lane.b32.xlu0 %v708, 111
        %v717 = vpop.permute.xlu0 %716
        %v718 = vsel %vm443, %v713, %v715
        %v719 = vsel %vm443, %v715, %v717
        %v722 = vsel %vm273, %v718, 0.0
        %v723 = vsel %vm274, %v719, 0.0
        %724 = vst [vmem:[#allocation3 + $0x40] sm:$0xf] %v722
        %725 = vst [vmem:[#allocation3 + $0x48] sm:$0xf] %v723
        %v726 = vld [vmem:[%s3] sm:$0xf]
        %v727 = vld [vmem:[#allocation3] sm:$0xff]
        %v728 = vld [vmem:[#allocation3 + $0x8] sm:$0xff]
        %v729 = vld [vmem:[#allocation3 + $0x10] sm:$0xff]
        %v730 = vld [vmem:[#allocation3 + $0x18] sm:$0xff]
        %v731 = vld [vmem:[#allocation3 + $0x20] sm:$0xff]
        %v732 = vld [vmem:[#allocation3 + $0x28] sm:$0xff]
        %v733 = vld [vmem:[#allocation3 + $0x30] sm:$0xff]
        %v734 = vld [vmem:[#allocation3 + $0x38] sm:$0xff]
        %v735 = vld [vmem:[#allocation3 + $0x40] sm:$0xf]
        %v736 = vld [vmem:[#allocation3 + $0x48] sm:$0xf]
        %v737 = vld [vmem:[%s4] sm:$0xf]
        %739 = vset.pattern.permute.xlu0 0
        %740 = vperm.xlu0 %739, %v737
        %v741 = vpop.permute.xlu0 %740
        %v744 = vsel %vm469, %v726, 0
        %v747 = vsel %vm473, %v735, 0
        %v750 = vsel %vm473, %v736, 0
        %752 = vmatprep.subr.mxu0 %v728
        %753 = vmatpush1.msra.mxu0 %v727
        %754 = vmatprep.subr.mxu0 %v730
        %755 = vmatpush1.msra.mxu0 %v729
        %756 = vmatprep.subr.mxu0 %v732
        %757 = vmatpush1.msra.mxu0 %v731
        %758 = vmatprep.subr.mxu0 %v734
        %759 = vmatpush1.msra.mxu0 %v733
        %760 = vmatprep.subr.mxu0 %v750
        %761 = vmatpush1.msra.mxu0 %v747
        %762 = vmatprep.subr.mxu0 0.0
        %763 = vmatpush1.msra.mxu0 0.0
        %764 = vmatprep.subr.mxu0 0.0
        %765 = vmatpush1.msra.mxu0 0.0
        %766 = vmatprep.subr.mxu0 0.0
        %767 = vmatpush1.msra.mxu0 0.0
        %768 = vmatprep.subr.mxu0 0.0
        %769 = vmatpush1.msra.mxu0 0.0
        %770 = vmatprep.subr.mxu0 0.0
        %771 = vmatpush1.msra.mxu0 0.0
        %772 = vmatprep.subr.mxu0 0.0
        %773 = vmatpush1.msra.mxu0 0.0
        %774 = vmatprep.subr.mxu0 0.0
        %775 = vmatpush1.msra.mxu0 0.0
        %776 = vmatprep.subr.mxu0 0.0
        %777 = vmatpush1.msra.mxu0 0.0
        %778 = vmatprep.subr.mxu0 0.0
        %779 = vmatpush1.msra.mxu0 0.0
        %780 = vmatprep.subr.mxu0 0.0
        %781 = vmatpush1.msra.mxu0 0.0
        %782 = vmatprep.subr.mxu0 0.0
        %783 = vmatpush1.msra.mxu0 0.0
        %784 = vmatprep.subr.mxu0 0.0
        %785 = vmatpush1.msra.mxu0 0.0
        %786 = vmatprep.subr.mxu0 0.0
        %787 = vmatpush1.msra.mxu0 0.0
        %788 = vmatprep.subr.mxu0 0.0
        %789 = vmatpush1.msra.mxu0 0.0
        %790 = vmatprep.subr.mxu0 0.0
        %791 = vmatpush1.msra.mxu0 0.0
        %792 = vmatprep.subr.mxu0 0.0
        %793 = vmatpush1.msra.mxu0 0.0
        %794 = vmatprep.subr.mxu0 0.0
        %795 = vmatpush1.msra.mxu0 0.0
        %796 = vmatprep.subr.mxu0 0.0
        %797 = vmatpush1.msra.mxu0 0.0
        %798 = vmatprep.subr.mxu0 0.0
        %799 = vmatpush1.msra.mxu0 0.0
        %800 = vmatprep.subr.mxu0 0.0
        %801 = vmatpush1.msra.mxu0 0.0
        %802 = vmatprep.subr.mxu0 0.0
        %803 = vmatpush1.msra.mxu0 0.0
        %804 = vmatprep.subr.mxu0 0.0
        %805 = vmatpush1.msra.mxu0 0.0
        %806 = vmatprep.subr.mxu0 0.0
        %807 = vmatpush1.msra.mxu0 0.0
        %808 = vmatprep.subr.mxu0 0.0
        %809 = vmatpush1.msra.mxu0 0.0
        %810 = vmatprep.subr.mxu0 0.0
        %811 = vmatpush1.msra.mxu0 0.0
        %812 = vmatprep.subr.mxu0 0.0
        %813 = vmatpush1.msra.mxu0 0.0
        %814 = vmatprep.subr.mxu0 0.0
        %815 = vmatpush1.msra.mxu0 0.0
        %816 = vmatprep.mubr.f32.mxu0 0.0
        %817 = vmatmul.mubr.f32.gmra.mrb[0].mxu0 %v744
        %v818 = vpop.f32.mrb[0].mxu0
        %v819 = vadd.f32 %v741, %v818
        %v820 = vpop.f32.mrb[0].mxu0
        %v821 = vadd.f32 %v741, %v820
        %822 = vdwg.mxu0
        %v824 = vcombine.high %v241, %v241
        %v826 = vadd.f32 %v819, %v241
        %v827 = vadd.f32 %v821, %v824
        %v830 = vcombine.low %v826, %v827
        %832 = vst [vmem:[%s240] sm:$0xff] %v830
        %s833 = sand.u32 %s140, 1
        %s834 = scalar_lea.sflag [#allocation6], %s833
        %s835 = sand.u32 %s140, 1
        %s836 = smul.addr %s835, 8
        %s837 = scalar_lea.vmem [#allocation7], %s836
        // Predicated region
        $region45: #{tpu_custom_call.1} parent=39 // pred_check
          %p838 = pneg %p150
        $region46: #{tpu_custom_call.1} parent=39 // pred_check_branch
          %840 = sbr.rel (%p838) target = $region48
        $region47: #{tpu_custom_call.1} parent=39 // pred_region
          %s842 = ssub.s32 128, 128
          %843 = vsyncadd %s834, %s842
          %s844 = smul.addr %s22, 2
          %s845 = smul.addr %s844, 64
          %s846 = scalar_lea.hbm %s5, %s845
          %s848 = sshll.u32 %s837, 4
          %s849 = int_to_ptr.vmem [resolvable:$true] %s848
          %851 = dma.vmem_to_hbm [thread:$0]  %s849, 128, %s846, %s834
        $region48: #{tpu_custom_call.1} parent=39 // pred_fallthru
          _
      $region40: #{tpu_custom_call.1} parent=5 // pred_fallthru
        _
      %p852 = scmp.le.s32.totalorder 2, %s17
      // Predicated region
      $region49: #{tpu_custom_call.1} parent=5 // pred_check
        %p853 = pneg %p852
      $region50: #{tpu_custom_call.1} parent=5 // pred_check_branch
        %855 = sbr.rel (%p853) target = $region52
      $region51: #{tpu_custom_call.1} parent=5 // pred_region
        %s856 = ssub.s32 %s17, 2
        // Predicated region
        $region53: #{tpu_custom_call.1} parent=51 // pred_check
          %p857 = pneg %p156
        $region54: #{tpu_custom_call.1} parent=51 // pred_check_branch
          %859 = sbr.rel (%p857) target = $region56
        $region55: #{tpu_custom_call.1} parent=51 // pred_region
          %s860 = sand.u32 %s141, 1
          %s861 = scalar_lea.sflag [#allocation6], %s860
          %s862 = sand.u32 %s141, 1
          %s863 = smul.addr %s862, 8
          %s864 = scalar_lea.vmem [#allocation7], %s863
          %865 = dma.done %s861, 128
        $region56: #{tpu_custom_call.1} parent=51 // pred_fallthru
          _
      $region52: #{tpu_custom_call.1} parent=5 // pred_fallthru
        _
    $region6: #{tpu_custom_call.1} parent=1 // loop_footer
      %s21 = sadd.s32 1, %s17
    $region7: #{tpu_custom_call.1} parent=1 // loop_footer_branch
      %16 = sbr.rel target = $region3
    $region8: #{tpu_custom_call.1} parent=1 // loop_exit
      _
    %866 = vsyncpa [#allocation5], 1
    %s867 = scalar_lea.sflag [#allocation5], 1
    %868 = vsyncpa %s867, 1
    %869 = vsyncpa [#allocation6], 1
    %s870 = scalar_lea.sflag [#allocation6], 1
    %871 = vsyncpa %s870, 1

</llo_original>
